<compile_context>
chip_gen: v7x
topology: tpu7x:2x2x1
jax: 0.10.0
libtpu: 0.0.40
codegen_flags: <defaults>
</compile_context>

<pallas_src>
import jax
import jax.numpy as jnp
from jax.experimental import pallas as pl
from jax.experimental.pallas import tpu as pltpu

IN_FEATURES = 30
HIDDEN = 50
OUT_FEATURES = 1


def _round_up(n, m):
    return ((n + m - 1) // m) * m


def _fused_linear_kernel(x_ref, w_ref, b_ref, o_ref):
    # x_ref: [block_b, 30]  VMEM tile of x (tail rows past B are unspecified; sliced off later)
    # w_ref: [1, 30]        folded weight (w2 @ w1), VMEM-resident across the grid
    # b_ref: [1, 1]         folded bias (w2 @ b1 + b2), SMEM scalar
    # o_ref: [1, block_b]   lane-dense output slab
    acc = jax.lax.dot_general(
        w_ref[...], x_ref[...],
        dimension_numbers=(((1,), (1,)), ((), ())),   # w @ x.T -> [1, block_b]
        preferred_element_type=jnp.float32,
    )
    o_ref[...] = (acc + b_ref[0, 0]).astype(o_ref.dtype)


def feedforward_forward(x, w1, b1, w2, b2, *, block_b=4096):
    """Forward pass of FeedForwardModel: x:[B,30] -> [B,1] (float32).

    Mathematically identical to linear2(linear1(x)); the algebraic fold only
    changes fp32 rounding order at the ~1e-6 level.
    """
    B = x.shape[0]
    assert x.shape[1] == IN_FEATURES

    # --- fold the two Linear layers once, outside the kernel (f32) ---
    w_eff = jnp.dot(w2.astype(jnp.float32), w1.astype(jnp.float32))                           # [1, 30]
    b_eff = jnp.dot(w2.astype(jnp.float32), b1.astype(jnp.float32)) + b2.astype(jnp.float32)  # [1]
    w_eff = w_eff.astype(x.dtype)
    b_eff_2d = b_eff.reshape(1, 1).astype(jnp.float32)

    # --- block selection: amortize per-step overhead, but keep >= 2 blocks when the
    # batch allows it so v7x's two TensorCores both get work ("parallel" grid axis).
    block_b = min(block_b, max(256, _round_up(pl.cdiv(B, 2), 256)))
    num_blocks = pl.cdiv(B, block_b)
    B_pad = num_blocks * block_b

    # --- VMEM budget: double-buffered, lane/sublane-padded tiles + headroom ---
    itemsize = jnp.dtype(x.dtype).itemsize
    x_tile_bytes = block_b * _round_up(IN_FEATURES, 128) * itemsize   # lane-padded input tile
    o_tile_bytes = 8 * block_b * 4                                    # sublane-padded f32 output tile
    w_tile_bytes = 8 * 128 * itemsize
    vmem_limit = int(2 * (x_tile_bytes + o_tile_bytes + w_tile_bytes) + (4 << 20))

    out = pl.pallas_call(
        _fused_linear_kernel,
        out_shape=jax.ShapeDtypeStruct((1, B_pad), jnp.float32),
        grid=(num_blocks,),
        in_specs=[
            pl.BlockSpec((block_b, IN_FEATURES), lambda i: (i, 0)),          # partial last block OK
            pl.BlockSpec((1, IN_FEATURES), lambda i: (0, 0)),                # weight, resident
            pl.BlockSpec((1, 1), lambda i: (0, 0), memory_space=pltpu.SMEM),  # bias scalar
        ],
        out_specs=pl.BlockSpec((1, block_b), lambda i: (0, i)),
        compiler_params=pltpu.CompilerParams(
            dimension_semantics=("parallel",),
            vmem_limit_bytes=vmem_limit,
        ),
    )(x, w_eff, b_eff_2d)

    # lane-dense slab -> [B, 1]; columns >= B (unspecified tail) are dropped here.
    return out.reshape(B_pad)[:B].reshape(B, OUT_FEATURES)


def init_params(key):
    """Deterministic init matching nn.Linear shapes (uniform +-1/sqrt(fan_in))."""
    k1, k2, k3, k4 = jax.random.split(key, 4)
    lim1 = 1.0 / jnp.sqrt(float(IN_FEATURES))
    lim2 = 1.0 / jnp.sqrt(float(HIDDEN))
    w1 = jax.random.uniform(k1, (HIDDEN, IN_FEATURES), jnp.float32, -lim1, lim1)
    b1 = jax.random.uniform(k2, (HIDDEN,), jnp.float32, -lim1, lim1)
    w2 = jax.random.uniform(k3, (OUT_FEATURES, HIDDEN), jnp.float32, -lim2, lim2)
    b2 = jax.random.uniform(k4, (OUT_FEATURES,), jnp.float32, -lim2, lim2)
    return w1, b1, w2, b2


def _reference(x, w1, b1, w2, b2):
    # Plain-JAX replica of the PyTorch forward: linear2(linear1(x)).
    return (x @ w1.T + b1) @ w2.T + b2


# TODO(synk): training pieces of the module (MSELoss, Adam step, backward/validate
# loops) are host-side training utilities, not part of the forward pass kernel.

if __name__ == "__main__":
    key = jax.random.PRNGKey(0)
    k_x, k_p, k_x2 = jax.random.split(key, 3)
    w1, b1, w2, b2 = init_params(k_p)

    # Small demo batch: single (overhanging) block — exercises the tail-masked DMA path.
    batch = 8
    x = jax.random.normal(k_x, (batch, IN_FEATURES), jnp.float32)
    out = jax.block_until_ready(feedforward_forward(x, w1, b1, w2, b2))
    ref = _reference(x, w1, b1, w2, b2)
    assert out.shape == (batch, OUT_FEATURES)
    assert jnp.allclose(out, ref, atol=2e-5, rtol=2e-5)

    # Larger batch: 2-block grid (megacore-friendly) + ragged trailing input block, no jnp.pad.
    batch2 = 2500
    x2 = jax.random.normal(k_x2, (batch2, IN_FEATURES), jnp.float32)
    out2 = jax.block_until_ready(feedforward_forward(x2, w1, b1, w2, b2))
    ref2 = _reference(x2, w1, b1, w2, b2)
    assert out2.shape == (batch2, OUT_FEATURES)
    assert jnp.allclose(out2, ref2, atol=2e-5, rtol=2e-5)

    print("KERNEL_OK")
</pallas_src>

<mosaic_0001>
module attributes {stable_mosaic.version = 11 : i64} {
  func.func @_fused_linear_kernel(%arg0: i32, %arg1: memref<256x30xf32, #tpu.memory_space<vmem>>, %arg2: memref<1x30xf32, #tpu.memory_space<vmem>>, %arg3: memref<1x1xf32, #tpu.memory_space<smem>>, %arg4: memref<1x256xf32, #tpu.memory_space<vmem>>) attributes {dimension_semantics = [#tpu.dimension_semantics<parallel>], iteration_bounds = array<i64: 1>, scalar_prefetch = 0 : i64, scratch_operands = 0 : i64, tpu.core_type = #tpu.core_type<tc>, window_params = [{transform_indices = @transform_0, window_bounds = array<i64: 256, 30>}, {pipeline_mode = #tpu.pipeline_mode<synchronous>, transform_indices = @transform_1, window_bounds = array<i64: 1, 30>}, {transform_indices = @transform_2, window_bounds = array<i64: 1, 1>}, {transform_indices = @transform_3, window_bounds = array<i64: 1, 256>}]} {
    %c0 = arith.constant 0 : index
    %c0_0 = arith.constant 0 : index
    %0 = vector.load %arg2[%c0, %c0_0] : memref<1x30xf32, #tpu.memory_space<vmem>>, vector<1x30xf32>
    %c0_1 = arith.constant 0 : index
    %c0_2 = arith.constant 0 : index
    %1 = vector.load %arg1[%c0_1, %c0_2] : memref<256x30xf32, #tpu.memory_space<vmem>>, vector<256x30xf32>
    %cst = arith.constant dense<0.000000e+00> : vector<1x256xf32>
    %2 = tpu.matmul %0, %1, %cst {dimension_numbers = #tpu.dot_dimension_numbers<[1], [1], [0], [0], [0, 0, 1, 0], [], []>} : vector<1x30xf32>, vector<256x30xf32>, vector<1x256xf32> -> vector<1x256xf32>
    %c0_3 = arith.constant 0 : index
    %c0_4 = arith.constant 0 : index
    %3 = memref.load %arg3[%c0_3, %c0_4] : memref<1x1xf32, #tpu.memory_space<smem>>
    %4 = vector.broadcast %3 : f32 to vector<1x256xf32>
    %5 = arith.addf %2, %4 : vector<1x256xf32>
    %c0_5 = arith.constant 0 : index
    %c0_6 = arith.constant 0 : index
    %6 = vector.load %arg4[%c0_5, %c0_6] : memref<1x256xf32, #tpu.memory_space<vmem>>, vector<1x256xf32>
    tpu.vector_store %arg4[%c0_5, %c0_6], %5 {strides = array<i32>} : memref<1x256xf32, #tpu.memory_space<vmem>>, vector<1x256xf32>,
    return
  }
  func.func @transform_0(%arg0: i32) -> (i32, i32) {
    %c0_i32 = arith.constant 0 : i32
    %c0_i32_0 = arith.constant 0 : i32
    return %arg0, %c0_i32 : i32, i32
  }
  func.func @transform_1(%arg0: i32) -> (i32, i32) {
    %c0_i32 = arith.constant 0 : i32
    %c0_i32_0 = arith.constant 0 : i32
    %c0_i32_1 = arith.constant 0 : i32
    return %c0_i32, %c0_i32_0 : i32, i32
  }
  func.func @transform_2(%arg0: i32) -> (i32, i32) {
    %c0_i32 = arith.constant 0 : i32
    %c0_i32_0 = arith.constant 0 : i32
    %c0_i32_1 = arith.constant 0 : i32
    return %c0_i32, %c0_i32_0 : i32, i32
  }
  func.func @transform_3(%arg0: i32) -> (i32, i32) {
    %c0_i32 = arith.constant 0 : i32
    %c0_i32_0 = arith.constant 0 : i32
    return %c0_i32, %arg0 : i32, i32
  }
}

</mosaic_0001>

<llo_original>
// kernel: tpu_custom_call.1
$region0: #{tpu_custom_call.1}
  #allocation0 [shape = 'u32[]', space=smem, size = 0x4, offset = 0x4, fixed_abs, tag = 'smem constant byte address 0x4 - core index']
  #allocation1 [shape = 'u32[144,128]{1,0:T(1,128)}', space=vmem, size = 0x12000, scoped, tag = 'internal scratch']
  #allocation2 [shape = 'f32[1,1]{1,0:T(1,128)S(6)}', space=smem, size = 0x200, scoped, tag = 'scoped memory for tpu_custom_call.1']
  %s0 = inlined_call_operand.hbm [shape: f32[8,30], index: 0, kind: input, shape index: {}]
  %s1 = inlined_call_operand.vmem [shape: f32[1,30], index: 1, kind: input, shape index: {}]
  %s2 = inlined_call_operand.<no memory space> [shape: f32[1,1], index: 2, kind: input, shape index: {}]
  %s3 = inlined_call_operand.hbm [shape: f32[1,256], index: 3, kind: output, shape index: {}]
  %s4 = sld [smem:[#allocation0]]
  $region26: #{tpu_custom_call.1} parent=0
    _
  %s6 = ssub.s32 1, %s4
  %s7 = scalar_select 0, %s6, %s4
  %8 = sst [smem:[#allocation2]] %s2
  $region1: #{tpu_custom_call.1} parent=0
    #allocation3 [shape = 'u8[131072]{0}', space=vmem, size = 0x20000, scoped, tag = 'input window, operand 0, single buffered']
    #allocation4 [shape = 's32[1]{0}', space=sflag, size = 0x4, scoped, tag = 'scoped memory for tpu_custom_call.1']
    #allocation5 [shape = 's32[1]{0}', space=sflag, size = 0x4, scoped, tag = 'scoped memory for tpu_custom_call.1']
    #allocation6 [shape = 'u8[1024]{0}', space=vmem, size = 0x400, scoped, tag = 'output window, operand 0, single buffered']
    %9 = vsyncpa [#allocation4], 0
    %10 = vsyncpa [#allocation5], 0
    // Predicated region
    $region2: #{tpu_custom_call.1} parent=1 // pred_check
      _
    $region3: #{tpu_custom_call.1} parent=1 // pred_check_branch
      %12 = sbr.rel (0) target = $region5
    $region4: #{tpu_custom_call.1} parent=1 // pred_region
      %s14 = ssub.s32 4096, 128
      %15 = vsyncadd [#allocation4], %s14
      %s16 = sshll.u32 [#allocation3], 4
      %s17 = int_to_ptr.vmem [resolvable:$true] %s16
      %22 = dma.hbm_to_vmem [thread:$0]  %s0, 128, %s17, [#allocation4], 128, 128, 8
    $region5: #{tpu_custom_call.1} parent=1 // pred_fallthru
      _
    // Predicated region
    $region6: #{tpu_custom_call.1} parent=1 // pred_check
      _
    $region7: #{tpu_custom_call.1} parent=1 // pred_check_branch
      %24 = sbr.rel (0) target = $region9
    $region8: #{tpu_custom_call.1} parent=1 // pred_region
      _
    $region9: #{tpu_custom_call.1} parent=1 // pred_fallthru
      _
    // Predicated region
    $region10: #{tpu_custom_call.1} parent=1 // pred_check
      _
    $region11: #{tpu_custom_call.1} parent=1 // pred_check_branch
      %26 = sbr.rel (0) target = $region13
    $region12: #{tpu_custom_call.1} parent=1 // pred_region
      _
    $region13: #{tpu_custom_call.1} parent=1 // pred_fallthru
      _
    // Predicated region
    $region14: #{tpu_custom_call.1} parent=1 // pred_check
      _
    $region15: #{tpu_custom_call.1} parent=1 // pred_check_branch
      %28 = sbr.rel (0) target = $region17
    $region16: #{tpu_custom_call.1} parent=1 // pred_region
      %29 = dma.done [#allocation4], 4096
    $region17: #{tpu_custom_call.1} parent=1 // pred_fallthru
      _
    %v30 = vld [vmem:[%s1] sm:$0x1]
    %v31 = vld [vmem:[#allocation3] sm:$0xff]
    %v32 = vld [vmem:[#allocation3 + $0x8] sm:$0xff]
    %v33 = vld [vmem:[#allocation3 + $0x10] sm:$0xff]
    %v34 = vld [vmem:[#allocation3 + $0x18] sm:$0xff]
    %v35 = vld [vmem:[#allocation3 + $0x20] sm:$0xff]
    %v36 = vld [vmem:[#allocation3 + $0x28] sm:$0xff]
    %v37 = vld [vmem:[#allocation3 + $0x30] sm:$0xff]
    %v38 = vld [vmem:[#allocation3 + $0x38] sm:$0xff]
    %v39 = vld [vmem:[#allocation3 + $0x40] sm:$0xff]
    %v40 = vld [vmem:[#allocation3 + $0x48] sm:$0xff]
    %v41 = vld [vmem:[#allocation3 + $0x50] sm:$0xff]
    %v42 = vld [vmem:[#allocation3 + $0x58] sm:$0xff]
    %v43 = vld [vmem:[#allocation3 + $0x60] sm:$0xff]
    %v44 = vld [vmem:[#allocation3 + $0x68] sm:$0xff]
    %v45 = vld [vmem:[#allocation3 + $0x70] sm:$0xff]
    %v46 = vld [vmem:[#allocation3 + $0x78] sm:$0xff]
    %v47 = vld [vmem:[#allocation3 + $0x80] sm:$0xff]
    %v48 = vld [vmem:[#allocation3 + $0x88] sm:$0xff]
    %v49 = vld [vmem:[#allocation3 + $0x90] sm:$0xff]
    %v50 = vld [vmem:[#allocation3 + $0x98] sm:$0xff]
    %v51 = vld [vmem:[#allocation3 + $0xa0] sm:$0xff]
    %v52 = vld [vmem:[#allocation3 + $0xa8] sm:$0xff]
    %v53 = vld [vmem:[#allocation3 + $0xb0] sm:$0xff]
    %v54 = vld [vmem:[#allocation3 + $0xb8] sm:$0xff]
    %v55 = vld [vmem:[#allocation3 + $0xc0] sm:$0xff]
    %v56 = vld [vmem:[#allocation3 + $0xc8] sm:$0xff]
    %v57 = vld [vmem:[#allocation3 + $0xd0] sm:$0xff]
    %v58 = vld [vmem:[#allocation3 + $0xd8] sm:$0xff]
    %v59 = vld [vmem:[#allocation3 + $0xe0] sm:$0xff]
    %v60 = vld [vmem:[#allocation3 + $0xe8] sm:$0xff]
    %v61 = vld [vmem:[#allocation3 + $0xf0] sm:$0xff]
    %v62 = vld [vmem:[#allocation3 + $0xf8] sm:$0xff]
    %s63 = sld [smem:[#allocation2]]
    %v64 = vstv %s63
    %vm65 = vcmask 244736
    %v67 = vsel %vm65, %v30, 0
    %v70 = vsel %vm65, %v31, 0
    %v73 = vsel %vm65, %v32, 0
    %v76 = vsel %vm65, %v33, 0
    %v79 = vsel %vm65, %v34, 0
    %v82 = vsel %vm65, %v35, 0
    %v85 = vsel %vm65, %v36, 0
    %v88 = vsel %vm65, %v37, 0
    %v91 = vsel %vm65, %v38, 0
    %v94 = vsel %vm65, %v39, 0
    %v97 = vsel %vm65, %v40, 0
    %v100 = vsel %vm65, %v41, 0
    %v103 = vsel %vm65, %v42, 0
    %v106 = vsel %vm65, %v43, 0
    %v109 = vsel %vm65, %v44, 0
    %v112 = vsel %vm65, %v45, 0
    %v115 = vsel %vm65, %v46, 0
    %v118 = vsel %vm65, %v47, 0
    %v121 = vsel %vm65, %v48, 0
    %v124 = vsel %vm65, %v49, 0
    %v127 = vsel %vm65, %v50, 0
    %v130 = vsel %vm65, %v51, 0
    %v133 = vsel %vm65, %v52, 0
    %v136 = vsel %vm65, %v53, 0
    %v139 = vsel %vm65, %v54, 0
    %v142 = vsel %vm65, %v55, 0
    %v145 = vsel %vm65, %v56, 0
    %v148 = vsel %vm65, %v57, 0
    %v151 = vsel %vm65, %v58, 0
    %v154 = vsel %vm65, %v59, 0
    %v157 = vsel %vm65, %v60, 0
    %v160 = vsel %vm65, %v61, 0
    %v163 = vsel %vm65, %v62, 0
    %165 = vmatprep.subr.mxu0 0.0
    %166 = vmatpush1.xpose.msra.mxu0 %v70
    %167 = vmatprep.subr.mxu0 0.0
    %168 = vmatpush1.xpose.msra.mxu0 %v73
    %169 = vmatprep.subr.mxu0 0.0
    %170 = vmatpush1.xpose.msra.mxu0 %v76
    %171 = vmatprep.subr.mxu0 0.0
    %172 = vmatpush1.xpose.msra.mxu0 %v79
    %173 = vmatprep.subr.mxu0 0.0
    %174 = vmatpush1.xpose.msra.mxu0 %v82
    %175 = vmatprep.subr.mxu0 0.0
    %176 = vmatpush1.xpose.msra.mxu0 %v85
    %177 = vmatprep.subr.mxu0 0.0
    %178 = vmatpush1.xpose.msra.mxu0 %v88
    %179 = vmatprep.subr.mxu0 0.0
    %180 = vmatpush1.xpose.msra.mxu0 %v91
    %181 = vmatprep.subr.mxu0 0.0
    %182 = vmatpush1.xpose.msra.mxu0 %v94
    %183 = vmatprep.subr.mxu0 0.0
    %184 = vmatpush1.xpose.msra.mxu0 %v97
    %185 = vmatprep.subr.mxu0 0.0
    %186 = vmatpush1.xpose.msra.mxu0 %v100
    %187 = vmatprep.subr.mxu0 0.0
    %188 = vmatpush1.xpose.msra.mxu0 %v103
    %189 = vmatprep.subr.mxu0 0.0
    %190 = vmatpush1.xpose.msra.mxu0 %v106
    %191 = vmatprep.subr.mxu0 0.0
    %192 = vmatpush1.xpose.msra.mxu0 %v109
    %193 = vmatprep.subr.mxu0 0.0
    %194 = vmatpush1.xpose.msra.mxu0 %v112
    %195 = vmatprep.subr.mxu0 0.0
    %196 = vmatpush1.xpose.msra.mxu0 %v115
    %197 = vmatprep.subr.mxu0 0.0
    %198 = vmatpush1.xpose.msra.mxu0 %v118
    %199 = vmatprep.subr.mxu0 0.0
    %200 = vmatpush1.xpose.msra.mxu0 %v121
    %201 = vmatprep.subr.mxu0 0.0
    %202 = vmatpush1.xpose.msra.mxu0 %v124
    %203 = vmatprep.subr.mxu0 0.0
    %204 = vmatpush1.xpose.msra.mxu0 %v127
    %205 = vmatprep.subr.mxu0 0.0
    %206 = vmatpush1.xpose.msra.mxu0 %v130
    %207 = vmatprep.subr.mxu0 0.0
    %208 = vmatpush1.xpose.msra.mxu0 %v133
    %209 = vmatprep.subr.mxu0 0.0
    %210 = vmatpush1.xpose.msra.mxu0 %v136
    %211 = vmatprep.subr.mxu0 0.0
    %212 = vmatpush1.xpose.msra.mxu0 %v139
    %213 = vmatprep.subr.mxu0 0.0
    %214 = vmatpush1.xpose.msra.mxu0 %v142
    %215 = vmatprep.subr.mxu0 0.0
    %216 = vmatpush1.xpose.msra.mxu0 %v145
    %217 = vmatprep.subr.mxu0 0.0
    %218 = vmatpush1.xpose.msra.mxu0 %v148
    %219 = vmatprep.subr.mxu0 0.0
    %220 = vmatpush1.xpose.msra.mxu0 %v151
    %221 = vmatprep.subr.mxu0 0.0
    %222 = vmatpush1.xpose.msra.mxu0 %v154
    %223 = vmatprep.subr.mxu0 0.0
    %224 = vmatpush1.xpose.msra.mxu0 %v157
    %225 = vmatprep.subr.mxu0 0.0
    %226 = vmatpush1.xpose.msra.mxu0 %v160
    %227 = vmatprep.subr.mxu0 0.0
    %228 = vmatpush1.xpose.msra.mxu0 %v163
    %229 = vmatprep.mubr.f32.mxu0 0.0
    %230 = vmatmul.mubr.f32.gmra.mrb[0].mxu0 %v67
    %v231 = vpop.f32.mrb[0].mxu0
    %v232 = vadd.f32 %v64, %v231
    %v233 = vpop.f32.mrb[0].mxu0
    %v234 = vadd.f32 %v64, %v233
    %235 = vdwg.mxu0
    %v238 = vcombine.low %v232, %v234
    %v240 = vunpack.c.l.s4 1966171168
    %v241 = vunpack.c.0.s8 %v240
    %v242 = vlaneseq
    %v243 = vshrl.u32 %v242, 7
    %v244 = vsub.s32 %v241, %v243
    %v245 = vrot.slane %v238, %v244
    %v247 = vunpack.c.l.s4 1966171168
    %v248 = vunpack.c.0.s8 %v247
    %v249 = vlaneseq
    %v250 = vshrl.u32 %v249, 7
    %v251 = vsub.s32 %v248, %v250
    %v252 = vrot.slane %v245, %v251
    %v254 = vlaneseq
    %vm255 = vcmp.ge.s32.totalorder %v254, 0
    %vm256 = vcmp.lt.s32.totalorder %v254, 256
    %vm257 = vmand %vm255, %vm256
    %258 = vst.msk [vmem:[#allocation6] sm:$0x3] %vm257, %v252
    // Predicated region
    $region18: #{tpu_custom_call.1} parent=1 // pred_check
      _
    $region19: #{tpu_custom_call.1} parent=1 // pred_check_branch
      %260 = sbr.rel (0) target = $region21
    $region20: #{tpu_custom_call.1} parent=1 // pred_region
      %s262 = ssub.s32 32, 32
      %263 = vsyncadd [#allocation5], %s262
      %s265 = sshll.u32 [#allocation6], 4
      %s266 = int_to_ptr.vmem [resolvable:$true] %s265
      %268 = dma.vmem_to_hbm [thread:$0]  %s266, 32, %s3, [#allocation5]
    $region21: #{tpu_custom_call.1} parent=1 // pred_fallthru
      _
    // Predicated region
    $region22: #{tpu_custom_call.1} parent=1 // pred_check
      _
    $region23: #{tpu_custom_call.1} parent=1 // pred_check_branch
      %270 = sbr.rel (0) target = $region25
    $region24: #{tpu_custom_call.1} parent=1 // pred_region
      %271 = dma.done [#allocation5], 32
    $region25: #{tpu_custom_call.1} parent=1 // pred_fallthru
      _
    %272 = vsyncpa [#allocation4], 1
    %273 = vsyncpa [#allocation5], 1

</llo_original>
